<compile_context>
chip_gen: v7x
topology: tpu7x:2x2x1
jax: 0.10.0
libtpu: 0.0.40
codegen_flags: <defaults>
</compile_context>

<pallas_src>
import functools

import jax
import jax.numpy as jnp
from jax.experimental import pallas as pl
from jax.experimental.pallas import tpu as pltpu


def _fused_gaussian_kernel(x_ref, w_ref, b_ref, o_ref):
    # Single fused matmul (mu | logvar packed along the lane axis) + bias add,
    # accumulated in f32 on the MXU, cast once at the store.
    o_ref[...] = (
        jnp.dot(x_ref[...], w_ref[...], preferred_element_type=jnp.float32)
        + b_ref[...]
    ).astype(o_ref.dtype)


def isotropic_gaussian_forward(x, w_mu, b_mu, w_lv, b_lv, *, tb=512):
    """Fused forward of IsotropicGaussianModule.

    x:    (B, D_in)
    w_*:  (D_in, D_out)   -- already transposed from PyTorch's (D_out, D_in)
    b_*:  (D_out,)
    Returns (mu, logvar), each (B, D_out).
    """
    B, D_in = x.shape
    D_out = w_mu.shape[1]
    n = 2 * D_out
    # Lane-dense output: pad packed output width up to a multiple of 128.
    n_pad = ((n + 127) // 128) * 128

    # Pack mu|logvar weights / biases into one slab (zero-padded lanes).
    w_cat = jnp.zeros((D_in, n_pad), dtype=w_mu.dtype)
    w_cat = w_cat.at[:, :D_out].set(w_mu).at[:, D_out:n].set(w_lv)
    b_cat = jnp.zeros((1, n_pad), dtype=b_mu.dtype)
    b_cat = b_cat.at[0, :D_out].set(b_mu).at[0, D_out:n].set(b_lv)

    if B <= tb:
        # Small batch: gridless call, every array is one full VMEM block.
        out = pl.pallas_call(
            _fused_gaussian_kernel,
            out_shape=jax.ShapeDtypeStruct((B, n_pad), x.dtype),
            in_specs=[
                pl.BlockSpec(memory_space=pltpu.MemorySpace.VMEM),
                pl.BlockSpec(memory_space=pltpu.MemorySpace.VMEM),
                pl.BlockSpec(memory_space=pltpu.MemorySpace.VMEM),
            ],
            out_specs=pl.BlockSpec(memory_space=pltpu.MemorySpace.VMEM),
        )(x, w_cat, b_cat)
    else:
        # Large batch: tile over B only; weights/bias stay resident across
        # steps (same block index every iteration => fetched once).
        bp = ((B + tb - 1) // tb) * tb
        xp = jnp.pad(x, ((0, bp - B), (0, 0))) if bp != B else x
        out = pl.pallas_call(
            _fused_gaussian_kernel,
            out_shape=jax.ShapeDtypeStruct((bp, n_pad), x.dtype),
            grid=(bp // tb,),
            in_specs=[
                pl.BlockSpec((tb, D_in), lambda i: (i, 0)),
                pl.BlockSpec((D_in, n_pad), lambda i: (0, 0)),
                pl.BlockSpec((1, n_pad), lambda i: (0, 0)),
            ],
            out_specs=pl.BlockSpec((tb, n_pad), lambda i: (i, 0)),
            compiler_params=pltpu.CompilerParams(
                dimension_semantics=("parallel",)
            ),
        )(xp, w_cat, b_cat)
        out = out[:B]

    mu = out[:, :D_out]
    logvar = out[:, D_out:n]
    return mu, logvar


if __name__ == "__main__":
    # Small shapes consistent with the module: batch=8, input_dim=32, output_dim=16.
    B, D_in, D_out = 8, 32, 16
    key = jax.random.PRNGKey(0)
    kx, kwm, kbm, kwl, kbl = jax.random.split(key, 5)

    x = jax.random.normal(kx, (B, D_in), dtype=jnp.float32)

    # PyTorch-like init: uniform(-1/sqrt(fan_in), +1/sqrt(fan_in)),
    # weights in PyTorch layout (D_out, D_in), transposed once outside the kernel.
    bound = 1.0 / (D_in ** 0.5)
    w_mu_pt = jax.random.uniform(kwm, (D_out, D_in), minval=-bound, maxval=bound)
    b_mu = jax.random.uniform(kbm, (D_out,), minval=-bound, maxval=bound)
    w_lv_pt = jax.random.uniform(kwl, (D_out, D_in), minval=-bound, maxval=bound)
    b_lv = jax.random.uniform(kbl, (D_out,), minval=-bound, maxval=bound)

    fwd = jax.jit(functools.partial(isotropic_gaussian_forward))
    mu, logvar = fwd(x, w_mu_pt.T, b_mu, w_lv_pt.T, b_lv)
    jax.block_until_ready((mu, logvar))

    # Reference check against plain JAX (mirrors the PyTorch forward).
    mu_ref = x @ w_mu_pt.T + b_mu
    lv_ref = x @ w_lv_pt.T + b_lv
    assert mu.shape == (B, D_out) and logvar.shape == (B, D_out)
    assert jnp.allclose(mu, mu_ref, atol=1e-5), "mu mismatch"
    assert jnp.allclose(logvar, lv_ref, atol=1e-5), "logvar mismatch"

    print("KERNEL_OK")
</pallas_src>

<mosaic_0001>
module attributes {stable_mosaic.version = 11 : i64} {
  func.func @_fused_gaussian_kernel(%arg0: memref<8x32xf32, #tpu.memory_space<vmem>>, %arg1: memref<32x128xf32, #tpu.memory_space<vmem>>, %arg2: memref<1x128xf32, #tpu.memory_space<vmem>>, %arg3: memref<8x128xf32, #tpu.memory_space<vmem>>) attributes {dimension_semantics = [], scalar_prefetch = 0 : i64, scratch_operands = 0 : i64, tpu.core_type = #tpu.core_type<tc>} {
    %c0 = arith.constant 0 : index
    %c0_0 = arith.constant 0 : index
    %0 = vector.load %arg0[%c0, %c0_0] : memref<8x32xf32, #tpu.memory_space<vmem>>, vector<8x32xf32>
    %c0_1 = arith.constant 0 : index
    %c0_2 = arith.constant 0 : index
    %1 = vector.load %arg1[%c0_1, %c0_2] : memref<32x128xf32, #tpu.memory_space<vmem>>, vector<32x128xf32>
    %cst = arith.constant dense<0.000000e+00> : vector<8x128xf32>
    %2 = tpu.matmul %0, %1, %cst {dimension_numbers = #tpu.dot_dimension_numbers<[1], [0], [0], [1], [0, 0, 1, 1], [], []>} : vector<8x32xf32>, vector<32x128xf32>, vector<8x128xf32> -> vector<8x128xf32>
    %c0_3 = arith.constant 0 : index
    %c0_4 = arith.constant 0 : index
    %3 = vector.load %arg2[%c0_3, %c0_4] : memref<1x128xf32, #tpu.memory_space<vmem>>, vector<1x128xf32>
    %4 = vector.broadcast %3 : vector<1x128xf32> to vector<8x128xf32>
    %5 = arith.addf %2, %4 : vector<8x128xf32>
    %c0_5 = arith.constant 0 : index
    %c0_6 = arith.constant 0 : index
    %6 = vector.load %arg3[%c0_5, %c0_6] : memref<8x128xf32, #tpu.memory_space<vmem>>, vector<8x128xf32>
    tpu.vector_store %arg3[%c0_5, %c0_6], %5 {strides = array<i32>} : memref<8x128xf32, #tpu.memory_space<vmem>>, vector<8x128xf32>,
    return
  }
}

</mosaic_0001>

<llo_original>
// kernel: isotropic_gaussian_forward.1
$region0: #{isotropic_gaussian_forward.1}
  #allocation0 [shape = 'u32[]', space=smem, size = 0x4, offset = 0x4, fixed_abs, tag = 'smem constant byte address 0x4 - core index']
  #allocation1 [shape = 'u32[144,128]{1,0:T(1,128)}', space=vmem, size = 0x12000, scoped, tag = 'internal scratch']
  %s0 = inlined_call_operand.vmem [shape: f32[8,32], index: 0, kind: input, shape index: {}]
  %s1 = inlined_call_operand.vmem [shape: f32[32,128], index: 1, kind: input, shape index: {}]
  %s2 = inlined_call_operand.vmem [shape: f32[1,128], index: 2, kind: input, shape index: {}]
  %s3 = inlined_call_operand.vmem [shape: f32[8,128], index: 3, kind: output, shape index: {}]
  %s4 = sld [smem:[#allocation0]]
  $region22: #{isotropic_gaussian_forward.1} parent=0
    _
  %s6 = ssub.s32 1, %s4
  %s7 = scalar_select 0, %s6, %s4
  // Predicated region
  $region2: #{isotropic_gaussian_forward.1} parent=0 // pred_check
    _
  $region3: #{isotropic_gaussian_forward.1} parent=0 // pred_check_branch
    %9 = sbr.rel (0) target = $region5
  $region4: #{isotropic_gaussian_forward.1} parent=0 // pred_region
    _
  $region5: #{isotropic_gaussian_forward.1} parent=0 // pred_fallthru
    _
  // Predicated region
  $region6: #{isotropic_gaussian_forward.1} parent=0 // pred_check
    _
  $region7: #{isotropic_gaussian_forward.1} parent=0 // pred_check_branch
    %11 = sbr.rel (0) target = $region9
  $region8: #{isotropic_gaussian_forward.1} parent=0 // pred_region
    _
  $region9: #{isotropic_gaussian_forward.1} parent=0 // pred_fallthru
    _
  // Predicated region
  $region10: #{isotropic_gaussian_forward.1} parent=0 // pred_check
    _
  $region11: #{isotropic_gaussian_forward.1} parent=0 // pred_check_branch
    %13 = sbr.rel (0) target = $region13
  $region12: #{isotropic_gaussian_forward.1} parent=0 // pred_region
    _
  $region13: #{isotropic_gaussian_forward.1} parent=0 // pred_fallthru
    _
  %v14 = vld [vmem:[%s0] sm:$0xff]
  %v15 = vld [vmem:[%s1] sm:$0xff]
  %v16 = vld [vmem:[%s1 + $0x8] sm:$0xff]
  %v17 = vld [vmem:[%s1 + $0x10] sm:$0xff]
  %v18 = vld [vmem:[%s1 + $0x18] sm:$0xff]
  %v19 = vld [vmem:[%s2] sm:$0x1]
  %v21 = vlaneseq
  %v22 = vshrl.u32 %v21, 7
  %v23 = vsub.s32 0, %v22
  %v24 = vrot.slane %v19, %v23
  %vm26 = vcmask 261120
  %v28 = vsel %vm26, %v14, 0
  %30 = vmatprep.subr.mxu0 0.0
  %31 = vmatpush1.msra.mxu0 %v15
  %32 = vmatprep.subr.mxu0 0.0
  %33 = vmatpush1.msra.mxu0 %v16
  %34 = vmatprep.subr.mxu0 0.0
  %35 = vmatpush1.msra.mxu0 %v17
  %36 = vmatprep.subr.mxu0 0.0
  %37 = vmatpush1.msra.mxu0 %v18
  %38 = vmatprep.subr.mxu0 0.0
  %39 = vmatpush1.msra.mxu0 0.0
  %40 = vmatprep.subr.mxu0 0.0
  %41 = vmatpush1.msra.mxu0 0.0
  %42 = vmatprep.subr.mxu0 0.0
  %43 = vmatpush1.msra.mxu0 0.0
  %44 = vmatprep.subr.mxu0 0.0
  %45 = vmatpush1.msra.mxu0 0.0
  %46 = vmatprep.subr.mxu0 0.0
  %47 = vmatpush1.msra.mxu0 0.0
  %48 = vmatprep.subr.mxu0 0.0
  %49 = vmatpush1.msra.mxu0 0.0
  %50 = vmatprep.subr.mxu0 0.0
  %51 = vmatpush1.msra.mxu0 0.0
  %52 = vmatprep.subr.mxu0 0.0
  %53 = vmatpush1.msra.mxu0 0.0
  %54 = vmatprep.subr.mxu0 0.0
  %55 = vmatpush1.msra.mxu0 0.0
  %56 = vmatprep.subr.mxu0 0.0
  %57 = vmatpush1.msra.mxu0 0.0
  %58 = vmatprep.subr.mxu0 0.0
  %59 = vmatpush1.msra.mxu0 0.0
  %60 = vmatprep.subr.mxu0 0.0
  %61 = vmatpush1.msra.mxu0 0.0
  %62 = vmatprep.subr.mxu0 0.0
  %63 = vmatpush1.msra.mxu0 0.0
  %64 = vmatprep.subr.mxu0 0.0
  %65 = vmatpush1.msra.mxu0 0.0
  %66 = vmatprep.subr.mxu0 0.0
  %67 = vmatpush1.msra.mxu0 0.0
  %68 = vmatprep.subr.mxu0 0.0
  %69 = vmatpush1.msra.mxu0 0.0
  %70 = vmatprep.subr.mxu0 0.0
  %71 = vmatpush1.msra.mxu0 0.0
  %72 = vmatprep.subr.mxu0 0.0
  %73 = vmatpush1.msra.mxu0 0.0
  %74 = vmatprep.subr.mxu0 0.0
  %75 = vmatpush1.msra.mxu0 0.0
  %76 = vmatprep.subr.mxu0 0.0
  %77 = vmatpush1.msra.mxu0 0.0
  %78 = vmatprep.subr.mxu0 0.0
  %79 = vmatpush1.msra.mxu0 0.0
  %80 = vmatprep.subr.mxu0 0.0
  %81 = vmatpush1.msra.mxu0 0.0
  %82 = vmatprep.subr.mxu0 0.0
  %83 = vmatpush1.msra.mxu0 0.0
  %84 = vmatprep.subr.mxu0 0.0
  %85 = vmatpush1.msra.mxu0 0.0
  %86 = vmatprep.subr.mxu0 0.0
  %87 = vmatpush1.msra.mxu0 0.0
  %88 = vmatprep.subr.mxu0 0.0
  %89 = vmatpush1.msra.mxu0 0.0
  %90 = vmatprep.subr.mxu0 0.0
  %91 = vmatpush1.msra.mxu0 0.0
  %92 = vmatprep.subr.mxu0 0.0
  %93 = vmatpush1.msra.mxu0 0.0
  %94 = vmatprep.mubr.f32.mxu0 0.0
  %95 = vmatmul.mubr.f32.gmra.mrb[0].mxu0 %v28
  %v96 = vpop.f32.mrb[0].mxu0
  %v97 = vadd.f32 %v24, %v96
  %v98 = vpop.f32.mrb[0].mxu0
  %99 = vdwg.mxu0
  %100 = vst [vmem:[%s3] sm:$0xff] %v97
  // Predicated region
  $region14: #{isotropic_gaussian_forward.1} parent=0 // pred_check
    _
  $region15: #{isotropic_gaussian_forward.1} parent=0 // pred_check_branch
    %102 = sbr.rel (0) target = $region17
  $region16: #{isotropic_gaussian_forward.1} parent=0 // pred_region
    _
  $region17: #{isotropic_gaussian_forward.1} parent=0 // pred_fallthru
    _
  // Predicated region
  $region18: #{isotropic_gaussian_forward.1} parent=0 // pred_check
    _
  $region19: #{isotropic_gaussian_forward.1} parent=0 // pred_check_branch
    %104 = sbr.rel (0) target = $region21
  $region20: #{isotropic_gaussian_forward.1} parent=0 // pred_region
    _
  $region21: #{isotropic_gaussian_forward.1} parent=0 // pred_fallthru
    _

</llo_original>
